<compile_context>
chip_gen: v5e
topology: v5e:2x2
jax: 0.10.0
libtpu: 0.0.40
codegen_flags: <defaults>
</compile_context>

<pallas_src>
import functools

import jax
import jax.numpy as jnp
import numpy as np
from jax.experimental import pallas as pl
from jax.experimental.pallas import tpu as pltpu

_LANES = 128
_MIN_SUBLANES = 8
_MAX_BLOCK_ROWS = 2048  # 2048*128 samples/block; 4 slabs * 2 bufs * 1 MiB = 8 MiB VMEM


def _metrics_kernel(t0_ref, t1_ref, p0_ref, p1_ref, out_ref, acc_ref, *, n_total):
    step = pl.program_id(0)

    @pl.when(step == 0)
    def _init():
        acc_ref[0] = 0.0  # tp
        acc_ref[1] = 0.0  # #(pred == 1)
        acc_ref[2] = 0.0  # #(targ == 1)

    # Module quirk preserved: "prediction" from y_true, "target" from y_pred.
    # C==2 argmax(dim=1): class 1 iff score[1] > score[0] (strict '>' keeps
    # torch.argmax first-index tie-breaking, i.e. ties resolve to class 0).
    pred1 = t1_ref[...] > t0_ref[...]
    targ1 = p1_ref[...] > p0_ref[...]

    acc_ref[0] += jnp.sum(jnp.logical_and(pred1, targ1).astype(jnp.float32))
    acc_ref[1] += jnp.sum(pred1.astype(jnp.float32))
    acc_ref[2] += jnp.sum(targ1.astype(jnp.float32))

    @pl.when(step == pl.num_programs(0) - 1)
    def _finalize():
        tp = acc_ref[0]
        fp = acc_ref[1] - tp
        fn = acc_ref[2] - tp
        total = jnp.float32(n_total)
        tn = total - tp - fp - fn
        # out layout (SMEM, float32[10]):
        # [acc, spec, prec, f1, rec, tn, fp, fn, tp, npv]
        out_ref[0] = (tp + tn) / total            # Accuracy
        out_ref[1] = tn / (tn + fp)               # Specificity
        out_ref[2] = tp / (tp + fp)               # Precision
        out_ref[3] = 2.0 * tp / (2.0 * tp + fp + fn)  # F1
        out_ref[4] = tp / (tp + fn)               # Recall
        out_ref[5] = tn
        out_ref[6] = fp
        out_ref[7] = fn
        out_ref[8] = tp
        out_ref[9] = tn / (tn + fn)               # NPV


def classification_metrics(y_true, y_pred, *, max_block_rows=_MAX_BLOCK_ROWS):
    """y_true, y_pred: (N, 2) float arrays (binary, class axis last). Returns metric dict."""
    y_true = jnp.asarray(y_true, jnp.float32)
    y_pred = jnp.asarray(y_pred, jnp.float32)
    n, c = y_true.shape
    assert c == 2, "ClassificationMetrics is binary (num_classes=2)"
    assert y_pred.shape == (n, c)

    # Lane-dense layout: samples map to (sublanes, 128 lanes). Padding samples are
    # class-0 for both prediction and target, so they never touch the tp /
    # #pred1 / #targ1 accumulators; tn is reconstructed from the true count n.
    min_chunk = _MIN_SUBLANES * _LANES
    rows = pl.cdiv(max(n, 1), min_chunk) * _MIN_SUBLANES
    block_rows = min(max_block_rows, rows)
    rows = pl.cdiv(rows, block_rows) * block_rows
    n_pad = rows * _LANES
    pad = n_pad - n

    def slabs(x):
        x0 = jnp.pad(x[:, 0], (0, pad), constant_values=1.0).reshape(rows, _LANES)
        x1 = jnp.pad(x[:, 1], (0, pad), constant_values=0.0).reshape(rows, _LANES)
        return x0, x1

    t0, t1 = slabs(y_true)
    p0, p1 = slabs(y_pred)

    grid = (rows // block_rows,)
    blk = lambda: pl.BlockSpec((block_rows, _LANES), lambda i: (i, 0))

    out = pl.pallas_call(
        functools.partial(_metrics_kernel, n_total=n),
        out_shape=jax.ShapeDtypeStruct((10,), jnp.float32),
        grid=grid,
        in_specs=[blk(), blk(), blk(), blk()],
        out_specs=pl.BlockSpec(memory_space=pltpu.MemorySpace.SMEM),
        scratch_shapes=[pltpu.SMEM((3,), jnp.float32)],
        compiler_params=pltpu.CompilerParams(dimension_semantics=("arbitrary",)),
    )(t0, t1, p0, p1)

    out = jax.block_until_ready(out)
    vals = np.asarray(jax.device_get(out))  # one host transfer for all 10 metrics
    return {
        "Accuracy": float(vals[0]),
        "Specificity": float(vals[1]),
        "Precision": float(vals[2]),
        "F1": float(vals[3]),
        "Recall": float(vals[4]),
        "ConfusionMatrix": [float(vals[5]), float(vals[6]), float(vals[7]), float(vals[8])],
        "NPV": float(vals[9]),
    }


def _reference(y_true, y_pred):
    pred = jnp.argmax(y_true, axis=1)
    targ = jnp.argmax(y_pred, axis=1)
    tp = jnp.sum((pred == 1) & (targ == 1)).astype(jnp.float32)
    tn = jnp.sum((pred == 0) & (targ == 0)).astype(jnp.float32)
    fp = jnp.sum((pred == 1) & (targ == 0)).astype(jnp.float32)
    fn = jnp.sum((pred == 0) & (targ == 1)).astype(jnp.float32)
    return {
        "Accuracy": (tp + tn) / (tp + tn + fp + fn),
        "Specificity": tn / (tn + fp),
        "Precision": tp / (tp + fp),
        "F1": 2 * tp / (2 * tp + fp + fn),
        "Recall": tp / (tp + fn),
        "ConfusionMatrix": [tn, fp, fn, tp],
        "NPV": tn / (tn + fn),
    }


if __name__ == "__main__":
    key = jax.random.PRNGKey(0)
    k1, k2, k3, k4 = jax.random.split(key, 4)

    def check(y_true, y_pred, **kw):
        result = classification_metrics(y_true, y_pred, **kw)
        ref = _reference(y_true, y_pred)
        for name in ["Accuracy", "Specificity", "Precision", "F1", "Recall", "NPV"]:
            assert abs(result[name] - float(ref[name])) < 1e-5, (name, result[name], float(ref[name]))
        for a, b in zip(result["ConfusionMatrix"], ref["ConfusionMatrix"]):
            assert abs(a - float(b)) < 1e-5, ("ConfusionMatrix", a, float(b))

    # Small binary-classification scores, PyTorch layout (N, num_classes=2).
    check(jax.random.normal(k1, (64, 2), dtype=jnp.float32),
          jax.random.normal(k2, (64, 2), dtype=jnp.float32))

    # Exercise the multi-step grid / SMEM accumulator path with a tiny block size.
    check(jax.random.normal(k3, (2500, 2), dtype=jnp.float32),
          jax.random.normal(k4, (2500, 2), dtype=jnp.float32),
          max_block_rows=8)

    print("KERNEL_OK")
</pallas_src>

<mosaic_0001>
module attributes {stable_mosaic.version = 11 : i64} {
  func.func @_metrics_kernel(%arg0: i32, %arg1: memref<8x128xf32, #tpu.memory_space<vmem>>, %arg2: memref<8x128xf32, #tpu.memory_space<vmem>>, %arg3: memref<8x128xf32, #tpu.memory_space<vmem>>, %arg4: memref<8x128xf32, #tpu.memory_space<vmem>>, %arg5: memref<10xf32, #tpu.memory_space<smem>>, %arg6: memref<3xf32, #tpu.memory_space<smem>>) attributes {dimension_semantics = [#tpu.dimension_semantics<arbitrary>], iteration_bounds = array<i64: 1>, scalar_prefetch = 0 : i64, scratch_operands = 1 : i64, tpu.core_type = #tpu.core_type<tc>, window_params = [{transform_indices = @transform_0, window_bounds = array<i64: 8, 128>}, {transform_indices = @transform_1, window_bounds = array<i64: 8, 128>}, {transform_indices = @transform_2, window_bounds = array<i64: 8, 128>}, {transform_indices = @transform_3, window_bounds = array<i64: 8, 128>}, {transform_indices = @transform_4, window_bounds = array<i64: 10>}]} {
    %c0_i32 = arith.constant 0 : i32
    %0 = arith.cmpi eq, %arg0, %c0_i32 : i32
    %1 = arith.extui %0 : i1 to i32
    %c0_i32_0 = arith.constant 0 : i32
    %2 = arith.cmpi ne, %1, %c0_i32_0 : i32
    scf.if %2 {
      %cst_16 = arith.constant 0.000000e+00 : f32
      %c0_17 = arith.constant 0 : index
      %40 = memref.load %arg6[%c0_17] : memref<3xf32, #tpu.memory_space<smem>>
      memref.store %cst_16, %arg6[%c0_17] : memref<3xf32, #tpu.memory_space<smem>>
      %cst_18 = arith.constant 0.000000e+00 : f32
      %c1_19 = arith.constant 1 : index
      %41 = memref.load %arg6[%c1_19] : memref<3xf32, #tpu.memory_space<smem>>
      memref.store %cst_18, %arg6[%c1_19] : memref<3xf32, #tpu.memory_space<smem>>
      %cst_20 = arith.constant 0.000000e+00 : f32
      %c2_21 = arith.constant 2 : index
      %42 = memref.load %arg6[%c2_21] : memref<3xf32, #tpu.memory_space<smem>>
      memref.store %cst_20, %arg6[%c2_21] : memref<3xf32, #tpu.memory_space<smem>>
    } else {
    }
    %c0 = arith.constant 0 : index
    %c0_1 = arith.constant 0 : index
    %3 = vector.load %arg2[%c0, %c0_1] : memref<8x128xf32, #tpu.memory_space<vmem>>, vector<8x128xf32>
    %c0_2 = arith.constant 0 : index
    %c0_3 = arith.constant 0 : index
    %4 = vector.load %arg1[%c0_2, %c0_3] : memref<8x128xf32, #tpu.memory_space<vmem>>, vector<8x128xf32>
    %5 = arith.cmpf ogt, %3, %4 : vector<8x128xf32>
    %c0_4 = arith.constant 0 : index
    %c0_5 = arith.constant 0 : index
    %6 = vector.load %arg4[%c0_4, %c0_5] : memref<8x128xf32, #tpu.memory_space<vmem>>, vector<8x128xf32>
    %c0_6 = arith.constant 0 : index
    %c0_7 = arith.constant 0 : index
    %7 = vector.load %arg3[%c0_6, %c0_7] : memref<8x128xf32, #tpu.memory_space<vmem>>, vector<8x128xf32>
    %8 = arith.cmpf ogt, %6, %7 : vector<8x128xf32>
    %c0_8 = arith.constant 0 : index
    %9 = memref.load %arg6[%c0_8] : memref<3xf32, #tpu.memory_space<smem>>
    %10 = arith.andi %5, %8 : vector<8x128xi1>
    %11 = arith.extui %10 : vector<8x128xi1> to vector<8x128xi32>
    %12 = arith.sitofp %11 : vector<8x128xi32> to vector<8x128xf32>
    %13 = vector.shape_cast %12 : vector<8x128xf32> to vector<1x8x128xf32>
    %cst = arith.constant dense<0.000000e+00> : vector<1xf32>
    %14 = vector.multi_reduction <add>, %13, %cst [1, 2] : vector<1x8x128xf32> to vector<1xf32>
    %15 = vector.shape_cast %14 : vector<1xf32> to vector<1x1x1xf32>
    %16 = vector.extract %15[0, 0, 0] : f32 from vector<1x1x1xf32>
    %17 = arith.addf %9, %16 : f32
    %c0_9 = arith.constant 0 : index
    %18 = memref.load %arg6[%c0_9] : memref<3xf32, #tpu.memory_space<smem>>
    memref.store %17, %arg6[%c0_9] : memref<3xf32, #tpu.memory_space<smem>>
    %c1 = arith.constant 1 : index
    %19 = memref.load %arg6[%c1] : memref<3xf32, #tpu.memory_space<smem>>
    %20 = arith.extui %5 : vector<8x128xi1> to vector<8x128xi32>
    %21 = arith.sitofp %20 : vector<8x128xi32> to vector<8x128xf32>
    %22 = vector.shape_cast %21 : vector<8x128xf32> to vector<1x8x128xf32>
    %cst_10 = arith.constant dense<0.000000e+00> : vector<1xf32>
    %23 = vector.multi_reduction <add>, %22, %cst_10 [1, 2] : vector<1x8x128xf32> to vector<1xf32>
    %24 = vector.shape_cast %23 : vector<1xf32> to vector<1x1x1xf32>
    %25 = vector.extract %24[0, 0, 0] : f32 from vector<1x1x1xf32>
    %26 = arith.addf %19, %25 : f32
    %c1_11 = arith.constant 1 : index
    %27 = memref.load %arg6[%c1_11] : memref<3xf32, #tpu.memory_space<smem>>
    memref.store %26, %arg6[%c1_11] : memref<3xf32, #tpu.memory_space<smem>>
    %c2 = arith.constant 2 : index
    %28 = memref.load %arg6[%c2] : memref<3xf32, #tpu.memory_space<smem>>
    %29 = arith.extui %8 : vector<8x128xi1> to vector<8x128xi32>
    %30 = arith.sitofp %29 : vector<8x128xi32> to vector<8x128xf32>
    %31 = vector.shape_cast %30 : vector<8x128xf32> to vector<1x8x128xf32>
    %cst_12 = arith.constant dense<0.000000e+00> : vector<1xf32>
    %32 = vector.multi_reduction <add>, %31, %cst_12 [1, 2] : vector<1x8x128xf32> to vector<1xf32>
    %33 = vector.shape_cast %32 : vector<1xf32> to vector<1x1x1xf32>
    %34 = vector.extract %33[0, 0, 0] : f32 from vector<1x1x1xf32>
    %35 = arith.addf %28, %34 : f32
    %c2_13 = arith.constant 2 : index
    %36 = memref.load %arg6[%c2_13] : memref<3xf32, #tpu.memory_space<smem>>
    memref.store %35, %arg6[%c2_13] : memref<3xf32, #tpu.memory_space<smem>>
    %c0_i32_14 = arith.constant 0 : i32
    %37 = arith.cmpi eq, %arg0, %c0_i32_14 : i32
    %38 = arith.extui %37 : i1 to i32
    %c0_i32_15 = arith.constant 0 : i32
    %39 = arith.cmpi ne, %38, %c0_i32_15 : i32
    scf.if %39 {
      %c0_16 = arith.constant 0 : index
      %40 = memref.load %arg6[%c0_16] : memref<3xf32, #tpu.memory_space<smem>>
      %c1_17 = arith.constant 1 : index
      %41 = memref.load %arg6[%c1_17] : memref<3xf32, #tpu.memory_space<smem>>
      %42 = arith.subf %41, %40 : f32
      %c2_18 = arith.constant 2 : index
      %43 = memref.load %arg6[%c2_18] : memref<3xf32, #tpu.memory_space<smem>>
      %44 = arith.subf %43, %40 : f32
      %cst_19 = arith.constant 6.400000e+01 : f32
      %45 = arith.subf %cst_19, %40 : f32
      %46 = arith.subf %45, %42 : f32
      %47 = arith.subf %46, %44 : f32
      %48 = arith.addf %40, %47 : f32
      %cst_20 = arith.constant 6.400000e+01 : f32
      %49 = arith.divf %48, %cst_20 : f32
      %c0_21 = arith.constant 0 : index
      %50 = memref.load %arg5[%c0_21] : memref<10xf32, #tpu.memory_space<smem>>
      memref.store %49, %arg5[%c0_21] : memref<10xf32, #tpu.memory_space<smem>>
      %51 = arith.addf %47, %42 : f32
      %52 = arith.divf %47, %51 : f32
      %c1_22 = arith.constant 1 : index
      %53 = memref.load %arg5[%c1_22] : memref<10xf32, #tpu.memory_space<smem>>
      memref.store %52, %arg5[%c1_22] : memref<10xf32, #tpu.memory_space<smem>>
      %54 = arith.addf %40, %42 : f32
      %55 = arith.divf %40, %54 : f32
      %c2_23 = arith.constant 2 : index
      %56 = memref.load %arg5[%c2_23] : memref<10xf32, #tpu.memory_space<smem>>
      memref.store %55, %arg5[%c2_23] : memref<10xf32, #tpu.memory_space<smem>>
      %cst_24 = arith.constant 2.000000e+00 : f32
      %57 = arith.mulf %cst_24, %40 : f32
      %cst_25 = arith.constant 2.000000e+00 : f32
      %58 = arith.mulf %cst_25, %40 : f32
      %59 = arith.addf %58, %42 : f32
      %60 = arith.addf %59, %44 : f32
      %61 = arith.divf %57, %60 : f32
      %c3 = arith.constant 3 : index
      %62 = memref.load %arg5[%c3] : memref<10xf32, #tpu.memory_space<smem>>
      memref.store %61, %arg5[%c3] : memref<10xf32, #tpu.memory_space<smem>>
      %63 = arith.addf %40, %44 : f32
      %64 = arith.divf %40, %63 : f32
      %c4 = arith.constant 4 : index
      %65 = memref.load %arg5[%c4] : memref<10xf32, #tpu.memory_space<smem>>
      memref.store %64, %arg5[%c4] : memref<10xf32, #tpu.memory_space<smem>>
      %c5 = arith.constant 5 : index
      %66 = memref.load %arg5[%c5] : memref<10xf32, #tpu.memory_space<smem>>
      memref.store %47, %arg5[%c5] : memref<10xf32, #tpu.memory_space<smem>>
      %c6 = arith.constant 6 : index
      %67 = memref.load %arg5[%c6] : memref<10xf32, #tpu.memory_space<smem>>
      memref.store %42, %arg5[%c6] : memref<10xf32, #tpu.memory_space<smem>>
      %c7 = arith.constant 7 : index
      %68 = memref.load %arg5[%c7] : memref<10xf32, #tpu.memory_space<smem>>
      memref.store %44, %arg5[%c7] : memref<10xf32, #tpu.memory_space<smem>>
      %c8 = arith.constant 8 : index
      %69 = memref.load %arg5[%c8] : memref<10xf32, #tpu.memory_space<smem>>
      memref.store %40, %arg5[%c8] : memref<10xf32, #tpu.memory_space<smem>>
      %70 = arith.addf %47, %44 : f32
      %71 = arith.divf %47, %70 : f32
      %c9 = arith.constant 9 : index
      %72 = memref.load %arg5[%c9] : memref<10xf32, #tpu.memory_space<smem>>
      memref.store %71, %arg5[%c9] : memref<10xf32, #tpu.memory_space<smem>>
    } else {
    }
    return
  }
  func.func @transform_0(%arg0: i32) -> (i32, i32) {
    %c0_i32 = arith.constant 0 : i32
    %c0_i32_0 = arith.constant 0 : i32
    return %arg0, %c0_i32 : i32, i32
  }
  func.func @transform_1(%arg0: i32) -> (i32, i32) {
    %c0_i32 = arith.constant 0 : i32
    %c0_i32_0 = arith.constant 0 : i32
    return %arg0, %c0_i32 : i32, i32
  }
  func.func @transform_2(%arg0: i32) -> (i32, i32) {
    %c0_i32 = arith.constant 0 : i32
    %c0_i32_0 = arith.constant 0 : i32
    return %arg0, %c0_i32 : i32, i32
  }
  func.func @transform_3(%arg0: i32) -> (i32, i32) {
    %c0_i32 = arith.constant 0 : i32
    %c0_i32_0 = arith.constant 0 : i32
    return %arg0, %c0_i32 : i32, i32
  }
  func.func @transform_4(%arg0: i32) -> i32 {
    %c0_i32 = arith.constant 0 : i32
    %c0_i32_0 = arith.constant 0 : i32
    return %c0_i32 : i32
  }
}

</mosaic_0001>

<llo_original>
// kernel: tpu_custom_call.1
$region0: #{tpu_custom_call.1}
  #allocation0 [shape = 'u32[]', space=smem, size = 0x4, offset = 0x4, fixed_abs, tag = 'smem constant byte address 0x4 - core index']
  #allocation1 [shape = 'u32[72,128]{1,0:T(1,128)}', space=vmem, size = 0x9000, scoped, tag = 'internal scratch']
  #allocation2 [shape = 'f32[3]{0:T(128)}', space=smem, size = 0x200, scoped, tag = 'scratch operand']
  %s0 = inlined_call_operand.hbm [shape: f32[8,128], index: 0, kind: input, shape index: {}]
  %s1 = inlined_call_operand.hbm [shape: f32[8,128], index: 1, kind: input, shape index: {}]
  %s2 = inlined_call_operand.hbm [shape: f32[8,128], index: 2, kind: input, shape index: {}]
  %s3 = inlined_call_operand.hbm [shape: f32[8,128], index: 3, kind: input, shape index: {}]
  %s4 = inlined_call_operand.hbm [shape: f32[10], index: 4, kind: output, shape index: {}]
  %s5 = sld [smem:[#allocation0]]
  $region50: #{tpu_custom_call.1} parent=0
    _
  %s7 = ssub.s32 1, %s5
  %s8 = scalar_select 0, %s7, %s5
  $region1: #{tpu_custom_call.1} parent=0
    #allocation3 [shape = 'u8[4096]{0}', space=vmem, size = 0x1000, scoped, tag = 'input window, operand 0, single buffered']
    #allocation4 [shape = 's32[1]{0}', space=sflag, size = 0x4, scoped, tag = 'scoped memory for tpu_custom_call.1']
    #allocation5 [shape = 's32[1]{0}', space=sflag, size = 0x4, scoped, tag = 'scoped memory for tpu_custom_call.1']
    #allocation6 [shape = 'u8[4096]{0}', space=vmem, size = 0x1000, scoped, tag = 'input window, operand 1, single buffered']
    #allocation7 [shape = 's32[1]{0}', space=sflag, size = 0x4, scoped, tag = 'scoped memory for tpu_custom_call.1']
    #allocation8 [shape = 'u8[4096]{0}', space=vmem, size = 0x1000, scoped, tag = 'input window, operand 2, single buffered']
    #allocation9 [shape = 'u8[4096]{0}', space=vmem, size = 0x1000, scoped, tag = 'input window, operand 3, single buffered']
    #allocation10 [shape = 's32[1]{0}', space=sflag, size = 0x4, scoped, tag = 'scoped memory for tpu_custom_call.1']
    #allocation11 [shape = 'u8[512]{0}', space=smem, size = 0x200, scoped, tag = 'output window, operand 0, single buffered']
    %9 = vsyncpa [#allocation4], 0
    %10 = vsyncpa [#allocation7], 0
    %11 = vsyncpa [#allocation10], 0
    %12 = vsyncpa [#allocation5], 0
    // Predicated region
    $region2: #{tpu_custom_call.1} parent=1 // pred_check
      _
    $region3: #{tpu_custom_call.1} parent=1 // pred_check_branch
      %14 = sbr.rel (0) target = $region5
    $region4: #{tpu_custom_call.1} parent=1 // pred_region
      %16 = vsyncadd [#allocation4], 0
      %s18 = sshll.u32 %s0, 4
      %s19 = int_to_ptr.hbm [resolvable:$true] %s18
      %s20 = sshll.u32 [#allocation3], 4
      %s21 = int_to_ptr.vmem [resolvable:$true] %s20
      %23 = dma.hbm_to_vmem [thread:$0]  %s19, 128, %s21, [#allocation4]
    $region5: #{tpu_custom_call.1} parent=1 // pred_fallthru
      _
    // Predicated region
    $region6: #{tpu_custom_call.1} parent=1 // pred_check
      _
    $region7: #{tpu_custom_call.1} parent=1 // pred_check_branch
      %25 = sbr.rel (0) target = $region9
    $region8: #{tpu_custom_call.1} parent=1 // pred_region
      %27 = vsyncadd [#allocation7], 0
      %s29 = sshll.u32 %s1, 4
      %s30 = int_to_ptr.hbm [resolvable:$true] %s29
      %s31 = sshll.u32 [#allocation6], 4
      %s32 = int_to_ptr.vmem [resolvable:$true] %s31
      %34 = dma.hbm_to_vmem [thread:$0]  %s30, 128, %s32, [#allocation7]
    $region9: #{tpu_custom_call.1} parent=1 // pred_fallthru
      _
    // Predicated region
    $region10: #{tpu_custom_call.1} parent=1 // pred_check
      _
    $region11: #{tpu_custom_call.1} parent=1 // pred_check_branch
      %36 = sbr.rel (0) target = $region13
    $region12: #{tpu_custom_call.1} parent=1 // pred_region
      %38 = vsyncadd [#allocation7], 0
      %s40 = sshll.u32 %s2, 4
      %s41 = int_to_ptr.hbm [resolvable:$true] %s40
      %s42 = sshll.u32 [#allocation8], 4
      %s43 = int_to_ptr.vmem [resolvable:$true] %s42
      %45 = dma.hbm_to_vmem [thread:$0]  %s41, 128, %s43, [#allocation7]
    $region13: #{tpu_custom_call.1} parent=1 // pred_fallthru
      _
    // Predicated region
    $region14: #{tpu_custom_call.1} parent=1 // pred_check
      _
    $region15: #{tpu_custom_call.1} parent=1 // pred_check_branch
      %47 = sbr.rel (0) target = $region17
    $region16: #{tpu_custom_call.1} parent=1 // pred_region
      %49 = vsyncadd [#allocation10], 0
      %s51 = sshll.u32 %s3, 4
      %s52 = int_to_ptr.hbm [resolvable:$true] %s51
      %s53 = sshll.u32 [#allocation9], 4
      %s54 = int_to_ptr.vmem [resolvable:$true] %s53
      %56 = dma.hbm_to_vmem [thread:$0]  %s52, 128, %s54, [#allocation10]
    $region17: #{tpu_custom_call.1} parent=1 // pred_fallthru
      _
    // Predicated region
    $region18: #{tpu_custom_call.1} parent=1 // pred_check
      _
    $region19: #{tpu_custom_call.1} parent=1 // pred_check_branch
      %58 = sbr.rel (0) target = $region21
    $region20: #{tpu_custom_call.1} parent=1 // pred_region
      %60 = dma.done [#allocation4], 128
    $region21: #{tpu_custom_call.1} parent=1 // pred_fallthru
      _
    // Predicated region
    $region22: #{tpu_custom_call.1} parent=1 // pred_check
      _
    $region23: #{tpu_custom_call.1} parent=1 // pred_check_branch
      %62 = sbr.rel (0) target = $region25
    $region24: #{tpu_custom_call.1} parent=1 // pred_region
      %64 = dma.done [#allocation7], 128
    $region25: #{tpu_custom_call.1} parent=1 // pred_fallthru
      _
    // Predicated region
    $region26: #{tpu_custom_call.1} parent=1 // pred_check
      _
    $region27: #{tpu_custom_call.1} parent=1 // pred_check_branch
      %66 = sbr.rel (0) target = $region29
    $region28: #{tpu_custom_call.1} parent=1 // pred_region
      %68 = dma.done [#allocation7], 128
    $region29: #{tpu_custom_call.1} parent=1 // pred_fallthru
      _
    // Predicated region
    $region30: #{tpu_custom_call.1} parent=1 // pred_check
      _
    $region31: #{tpu_custom_call.1} parent=1 // pred_check_branch
      %70 = sbr.rel (0) target = $region33
    $region32: #{tpu_custom_call.1} parent=1 // pred_region
      %72 = dma.done [#allocation10], 128
    $region33: #{tpu_custom_call.1} parent=1 // pred_fallthru
      _
    %p73 = scmp.eq.s32.totalorder 0, 0
    // Predicated region
    $region34: #{tpu_custom_call.1} parent=1 // pred_check
      %p74 = pneg %p73
    $region35: #{tpu_custom_call.1} parent=1 // pred_check_branch
      %76 = sbr.rel (%p74) target = $region37
    $region36: #{tpu_custom_call.1} parent=1 // pred_region
      %s77 = scalar_lea.smem [#allocation2], 0
      %78 = sst [smem:[%s77]] 0.0
      %s79 = scalar_lea.smem [#allocation2], 1
      %80 = sst [smem:[%s79]] 0.0
      %s81 = scalar_lea.smem [#allocation2], 2
      %82 = sst [smem:[%s81]] 0.0
    $region37: #{tpu_custom_call.1} parent=1 // pred_fallthru
      _
    %v83 = vld [vmem:[#allocation6] sm:$0xff]
    %v84 = vld [vmem:[#allocation3] sm:$0xff]
    %vm85 = vcmp.gt.f32.partialorder %v83, %v84
    %v86 = vld [vmem:[#allocation9] sm:$0xff]
    %v87 = vld [vmem:[#allocation8] sm:$0xff]
    %vm88 = vcmp.gt.f32.partialorder %v86, %v87
    %s89 = sld [smem:[#allocation2]]
    %vm90 = vmand %vm85, %vm88
    %v91 = vsel %vm90, 1, 0
    %v92 = vcvt.s32.f32 %v91
    %93 = vadd.xlane.f32.xlu0 %v92
    %v94 = vpop.xlane.xlu0 %93
    %v95 = vrot.slane %v94, 4
    %v96 = vadd.f32 %v94, %v95
    %v97 = vrot.slane %v96, 2
    %v98 = vadd.f32 %v96, %v97
    %v99 = vrot.slane %v98, 1
    %v100 = vadd.f32 %v98, %v99
    %s101 = vtos %v100
    %s102 = sadd.f32 %s89, %s101
    %s103 = scalar_lea.smem [#allocation2], 0
    %104 = sst [smem:[%s103]] %s102
    %s105 = sld [smem:[#allocation2 + $0x1]]
    %v106 = vsel %vm85, 1, 0
    %v107 = vcvt.s32.f32 %v106
    %108 = vadd.xlane.f32.xlu0 %v107
    %v109 = vpop.xlane.xlu0 %108
    %v110 = vrot.slane %v109, 4
    %v111 = vadd.f32 %v109, %v110
    %v112 = vrot.slane %v111, 2
    %v113 = vadd.f32 %v111, %v112
    %v114 = vrot.slane %v113, 1
    %v115 = vadd.f32 %v113, %v114
    %s116 = vtos %v115
    %s117 = sadd.f32 %s105, %s116
    %s118 = scalar_lea.smem [#allocation2], 1
    %119 = sst [smem:[%s118]] %s117
    %s120 = sld [smem:[#allocation2 + $0x2]]
    %v121 = vsel %vm88, 1, 0
    %v122 = vcvt.s32.f32 %v121
    %123 = vadd.xlane.f32.xlu0 %v122
    %v124 = vpop.xlane.xlu0 %123
    %v125 = vrot.slane %v124, 4
    %v126 = vadd.f32 %v124, %v125
    %v127 = vrot.slane %v126, 2
    %v128 = vadd.f32 %v126, %v127
    %v129 = vrot.slane %v128, 1
    %v130 = vadd.f32 %v128, %v129
    %s131 = vtos %v130
    %s132 = sadd.f32 %s120, %s131
    %s133 = scalar_lea.smem [#allocation2], 2
    %134 = sst [smem:[%s133]] %s132
    // Predicated region
    $region38: #{tpu_custom_call.1} parent=1 // pred_check
      %p135 = pneg %p73
    $region39: #{tpu_custom_call.1} parent=1 // pred_check_branch
      %137 = sbr.rel (%p135) target = $region41
    $region40: #{tpu_custom_call.1} parent=1 // pred_region
      %s138 = sld [smem:[#allocation2]]
      %s139 = sld [smem:[#allocation2 + $0x1]]
      %s140 = ssub.f32 %s139, %s138
      %s141 = sld [smem:[#allocation2 + $0x2]]
      %s142 = ssub.f32 %s141, %s138
      %s143 = ssub.f32 64.0, %s138
      %s144 = ssub.f32 %s143, %s140
      %s145 = ssub.f32 %s144, %s142
      %s146 = sadd.f32 %s138, %s145
      %v147 = vrcp.pop 64.0
      %v148 = vmul.f32 64.0, %v147
      %v149 = vsub.f32 1.0, %v148
      %v150 = vmul.f32 %v147, %v149
      %v151 = vadd.f32 %v147, %v150
      %vm152 = vweird.f32 %v147
      %v153 = vsel %vm152, %v147, %v151
      %s154 = vtos %v153
      %s155 = smul.f32 %s146, %s154
      %s156 = scalar_lea.smem [#allocation11], 0
      %157 = sst [smem:[%s156]] %s155
      %s158 = sadd.f32 %s145, %s140
      %v159 = vstv %s158
      %v160 = vrcp.pop %v159
      %v161 = vmul.f32 %v159, %v160
      %v162 = vsub.f32 1.0, %v161
      %v163 = vmul.f32 %v160, %v162
      %v164 = vadd.f32 %v160, %v163
      %vm165 = vweird.f32 %v159
      %vm166 = vweird.f32 %v160
      %vm167 = vmor %vm165, %vm166
      %v168 = vsel %vm167, %v160, %v164
      %v169 = vand.u32 2147483647, %v159
      %vm170 = vcmp.eq.f32.partialorder %v169, 8.507059e+37
      %v171 = vand.u32 %v159, 2147483648
      %v172 = vor.u32 1.1754944e-38, %v171
      %v173 = vsel %vm170, %v172, %v168
      %s174 = vtos %v173
      %s175 = smul.f32 %s145, %s174
      %s176 = scalar_lea.smem [#allocation11], 1
      %177 = sst [smem:[%s176]] %s175
      %s178 = sadd.f32 %s138, %s140
      %v179 = vstv %s178
      %v180 = vrcp.pop %v179
      %v181 = vmul.f32 %v179, %v180
      %v182 = vsub.f32 1.0, %v181
      %v183 = vmul.f32 %v180, %v182
      %v184 = vadd.f32 %v180, %v183
      %vm185 = vweird.f32 %v179
      %vm186 = vweird.f32 %v180
      %vm187 = vmor %vm185, %vm186
      %v188 = vsel %vm187, %v180, %v184
      %v189 = vand.u32 2147483647, %v179
      %vm190 = vcmp.eq.f32.partialorder %v189, 8.507059e+37
      %v191 = vand.u32 %v179, 2147483648
      %v192 = vor.u32 1.1754944e-38, %v191
      %v193 = vsel %vm190, %v192, %v188
      %s194 = vtos %v193
      %s195 = smul.f32 %s138, %s194
      %s196 = scalar_lea.smem [#allocation11], 2
      %197 = sst [smem:[%s196]] %s195
      %s198 = smul.f32 %s138, 2.0
      %s199 = sadd.f32 %s198, %s140
      %s200 = sadd.f32 %s199, %s142
      %v201 = vstv %s200
      %v202 = vrcp.pop %v201
      %v203 = vmul.f32 %v201, %v202
      %v204 = vsub.f32 1.0, %v203
      %v205 = vmul.f32 %v202, %v204
      %v206 = vadd.f32 %v202, %v205
      %vm207 = vweird.f32 %v201
      %vm208 = vweird.f32 %v202
      %vm209 = vmor %vm207, %vm208
      %v210 = vsel %vm209, %v202, %v206
      %v211 = vand.u32 2147483647, %v201
      %vm212 = vcmp.eq.f32.partialorder %v211, 8.507059e+37
      %v213 = vand.u32 %v201, 2147483648
      %v214 = vor.u32 1.1754944e-38, %v213
      %v215 = vsel %vm212, %v214, %v210
      %s216 = vtos %v215
      %s217 = smul.f32 %s198, %s216
      %s218 = scalar_lea.smem [#allocation11], 3
      %219 = sst [smem:[%s218]] %s217
      %s220 = sadd.f32 %s138, %s142
      %v221 = vstv %s220
      %v222 = vrcp.pop %v221
      %v223 = vmul.f32 %v221, %v222
      %v224 = vsub.f32 1.0, %v223
      %v225 = vmul.f32 %v222, %v224
      %v226 = vadd.f32 %v222, %v225
      %vm227 = vweird.f32 %v221
      %vm228 = vweird.f32 %v222
      %vm229 = vmor %vm227, %vm228
      %v230 = vsel %vm229, %v222, %v226
      %v231 = vand.u32 2147483647, %v221
      %vm232 = vcmp.eq.f32.partialorder %v231, 8.507059e+37
      %v233 = vand.u32 %v221, 2147483648
      %v234 = vor.u32 1.1754944e-38, %v233
      %v235 = vsel %vm232, %v234, %v230
      %s236 = vtos %v235
      %s237 = smul.f32 %s138, %s236
      %s238 = scalar_lea.smem [#allocation11], 4
      %239 = sst [smem:[%s238]] %s237
      %s240 = scalar_lea.smem [#allocation11], 5
      %241 = sst [smem:[%s240]] %s145
      %s242 = scalar_lea.smem [#allocation11], 6
      %243 = sst [smem:[%s242]] %s140
      %s244 = scalar_lea.smem [#allocation11], 7
      %245 = sst [smem:[%s244]] %s142
      %s246 = scalar_lea.smem [#allocation11], 8
      %247 = sst [smem:[%s246]] %s138
      %s248 = sadd.f32 %s145, %s142
      %v249 = vstv %s248
      %v250 = vrcp.pop %v249
      %v251 = vmul.f32 %v249, %v250
      %v252 = vsub.f32 1.0, %v251
      %v253 = vmul.f32 %v250, %v252
      %v254 = vadd.f32 %v250, %v253
      %vm255 = vweird.f32 %v249
      %vm256 = vweird.f32 %v250
      %vm257 = vmor %vm255, %vm256
      %v258 = vsel %vm257, %v250, %v254
      %v259 = vand.u32 2147483647, %v249
      %vm260 = vcmp.eq.f32.partialorder %v259, 8.507059e+37
      %v261 = vand.u32 %v249, 2147483648
      %v262 = vor.u32 1.1754944e-38, %v261
      %v263 = vsel %vm260, %v262, %v258
      %s264 = vtos %v263
      %s265 = smul.f32 %s145, %s264
      %s266 = scalar_lea.smem [#allocation11], 9
      %267 = sst [smem:[%s266]] %s265
    $region41: #{tpu_custom_call.1} parent=1 // pred_fallthru
      _
    // Predicated region
    $region42: #{tpu_custom_call.1} parent=1 // pred_check
      _
    $region43: #{tpu_custom_call.1} parent=1 // pred_check_branch
      %269 = sbr.rel (0) target = $region45
    $region44: #{tpu_custom_call.1} parent=1 // pred_region
      %271 = vsyncadd [#allocation5], 0
      %s273 = sshll.u32 %s4, 4
      %s274 = int_to_ptr.hbm [resolvable:$true] %s273
      %276 = dma.smem_to_hbm [#allocation11], 16, %s274, [#allocation5]
    $region45: #{tpu_custom_call.1} parent=1 // pred_fallthru
      _
    // Predicated region
    $region46: #{tpu_custom_call.1} parent=1 // pred_check
      _
    $region47: #{tpu_custom_call.1} parent=1 // pred_check_branch
      %278 = sbr.rel (0) target = $region49
    $region48: #{tpu_custom_call.1} parent=1 // pred_region
      %280 = dma.done [#allocation5], 16
    $region49: #{tpu_custom_call.1} parent=1 // pred_fallthru
      _
    %281 = sfence
    %282 = vsyncpa [#allocation4], 1
    %283 = vsyncpa [#allocation7], 1
    %284 = vsyncpa [#allocation10], 1
    %285 = vsyncpa [#allocation5], 1

</llo_original>
